<compile_context>
chip_gen: v5e
topology: v5e:2x2
jax: 0.10.0
libtpu: 0.0.40
codegen_flags: <defaults>
</compile_context>

<pallas_src>
import jax
import jax.numpy as jnp
from jax.experimental import pallas as pl
from jax.experimental.pallas import tpu as pltpu

IN_FEATURES = 2
OUT_FEATURES = 1

LANE = 128           # TPU lane width (last-dim tiling quantum)
MAX_TILE = 65536     # batch elements (lanes) per grid step:
                     #   (2*T + T) * 4 B * 2 (double-buffer) = 1.5 MiB/step
                     #   -> far below scoped VMEM limits on v5e/v6e/v7x,
                     #   and large enough to amortize per-step overhead.


def _round_up(x: int, m: int) -> int:
    return ((x + m - 1) // m) * m


def _linreg_kernel(params_ref, x_ref, o_ref):
    # params_ref: SMEM (3,) f32 = [w0, w1, b]
    # x_ref:      VMEM (2, tile) f32   (feature-major, batch on lanes)
    # o_ref:      VMEM (1, tile) f32
    w0 = params_ref[0]
    w1 = params_ref[1]
    b = params_ref[2]
    x0 = x_ref[0:1, :]                    # (1, tile) sublane slice
    x1 = x_ref[1:2, :]                    # (1, tile)
    o_ref[...] = x0 * w0 + x1 * w1 + b    # two VPU FMAs + scalar bias broadcast


@jax.jit
def linreg_forward(x, weight, bias):
    """y = x @ weight.T + bias   (weight: (1, 2), bias: (1,)) — torch Linear(2, 1)."""
    batch = x.shape[0]

    # Static tiling decisions (shapes are static under jit).
    batch_pad = _round_up(batch, LANE)
    if batch_pad <= MAX_TILE:
        tile = batch_pad
    else:
        tile = MAX_TILE
        batch_pad = _round_up(batch_pad, tile)
    grid = batch_pad // tile

    # Feature-major input: (2, batch_pad), batch on the lane axis.
    # (This transpose/pad is a single cheap XLA layout pass outside the kernel.)
    x_t = jnp.pad(
        x.astype(jnp.float32).T, ((0, 0), (0, batch_pad - batch))
    )
    # [w0, w1, b] packed as SMEM-resident scalars.
    params = jnp.concatenate(
        [weight.astype(jnp.float32).reshape(-1), bias.astype(jnp.float32).reshape(-1)]
    )

    out_t = pl.pallas_call(
        _linreg_kernel,
        out_shape=jax.ShapeDtypeStruct((OUT_FEATURES, batch_pad), jnp.float32),
        grid=(grid,),
        in_specs=[
            pl.BlockSpec(memory_space=pltpu.MemorySpace.SMEM),        # params (whole)
            pl.BlockSpec((IN_FEATURES, tile), lambda i: (0, i)),      # x tile
        ],
        out_specs=pl.BlockSpec((OUT_FEATURES, tile), lambda i: (0, i)),
        compiler_params=pltpu.CompilerParams(
            dimension_semantics=("parallel",),
        ),
        cost_estimate=pl.CostEstimate(
            flops=4 * batch_pad,
            transcendentals=0,
            bytes_accessed=12 * batch_pad + 12,
        ),
    )(params, x_t)

    # Back to the PyTorch (batch, 1) layout; drop lane padding.
    return out_t[0, :batch][:, None]


def init_params(key):
    """Deterministic init mimicking nn.Linear(2, 1) default (U[-1/sqrt(fan_in), ..])."""
    k_w, k_b = jax.random.split(key)
    bound = 1.0 / jnp.sqrt(jnp.float32(IN_FEATURES))
    weight = jax.random.uniform(
        k_w, (OUT_FEATURES, IN_FEATURES), jnp.float32, -bound, bound
    )
    bias = jax.random.uniform(k_b, (OUT_FEATURES,), jnp.float32, -bound, bound)
    return weight, bias


if __name__ == "__main__":
    key = jax.random.PRNGKey(0)
    k_x, k_p = jax.random.split(key)

    batch = 8
    x = jax.random.normal(k_x, (batch, IN_FEATURES), jnp.float32)
    weight, bias = init_params(k_p)

    y = linreg_forward(x, weight, bias)
    jax.block_until_ready(y)

    # Reference check in plain JAX (same semantics as torch Linear).
    y_ref = x @ weight.T + bias
    assert y.shape == (batch, OUT_FEATURES)
    assert jnp.allclose(y, y_ref, atol=1e-5, rtol=1e-5)

    print("KERNEL_OK")
</pallas_src>

<mosaic_0001>
module attributes {stable_mosaic.version = 11 : i64} {
  func.func @_linreg_kernel(%arg0: i32, %arg1: memref<3xf32, #tpu.memory_space<smem>>, %arg2: memref<2x128xf32, #tpu.memory_space<vmem>>, %arg3: memref<1x128xf32, #tpu.memory_space<vmem>>) attributes {dimension_semantics = [#tpu.dimension_semantics<parallel>], iteration_bounds = array<i64: 1>, scalar_prefetch = 0 : i64, scratch_operands = 0 : i64, tpu.core_type = #tpu.core_type<tc>, window_params = [{transform_indices = @transform_0, window_bounds = array<i64: 3>}, {transform_indices = @transform_1, window_bounds = array<i64: 2, 128>}, {transform_indices = @transform_2, window_bounds = array<i64: 1, 128>}]} {
    %c0 = arith.constant 0 : index
    %0 = memref.load %arg1[%c0] : memref<3xf32, #tpu.memory_space<smem>>
    %c1 = arith.constant 1 : index
    %1 = memref.load %arg1[%c1] : memref<3xf32, #tpu.memory_space<smem>>
    %c2 = arith.constant 2 : index
    %2 = memref.load %arg1[%c2] : memref<3xf32, #tpu.memory_space<smem>>
    %c0_0 = arith.constant 0 : index
    %c0_1 = arith.constant 0 : index
    %3 = vector.load %arg2[%c0_0, %c0_1] : memref<2x128xf32, #tpu.memory_space<vmem>>, vector<1x128xf32>
    %c1_2 = arith.constant 1 : index
    %c0_3 = arith.constant 0 : index
    %4 = vector.load %arg2[%c1_2, %c0_3] : memref<2x128xf32, #tpu.memory_space<vmem>>, vector<1x128xf32>
    %5 = vector.broadcast %0 : f32 to vector<1x128xf32>
    %6 = arith.mulf %3, %5 : vector<1x128xf32>
    %7 = vector.broadcast %1 : f32 to vector<1x128xf32>
    %8 = arith.mulf %4, %7 : vector<1x128xf32>
    %9 = arith.addf %6, %8 : vector<1x128xf32>
    %10 = vector.broadcast %2 : f32 to vector<1x128xf32>
    %11 = arith.addf %9, %10 : vector<1x128xf32>
    %c0_4 = arith.constant 0 : index
    %c0_5 = arith.constant 0 : index
    %12 = vector.load %arg3[%c0_4, %c0_5] : memref<1x128xf32, #tpu.memory_space<vmem>>, vector<1x128xf32>
    tpu.vector_store %arg3[%c0_4, %c0_5], %11 {strides = array<i32>} : memref<1x128xf32, #tpu.memory_space<vmem>>, vector<1x128xf32>,
    return
  }
  func.func @transform_0(%arg0: i32) -> i32 {
    %c0_i32 = arith.constant 0 : i32
    %c0_i32_0 = arith.constant 0 : i32
    return %c0_i32 : i32
  }
  func.func @transform_1(%arg0: i32) -> (i32, i32) {
    %c0_i32 = arith.constant 0 : i32
    %c0_i32_0 = arith.constant 0 : i32
    return %c0_i32, %arg0 : i32, i32
  }
  func.func @transform_2(%arg0: i32) -> (i32, i32) {
    %c0_i32 = arith.constant 0 : i32
    %c0_i32_0 = arith.constant 0 : i32
    return %c0_i32, %arg0 : i32, i32
  }
}

</mosaic_0001>

<llo_original>
// kernel: linreg_forward.1
$region0: #{linreg_forward.1}
  #allocation0 [shape = 'u32[]', space=smem, size = 0x4, offset = 0x4, fixed_abs, tag = 'smem constant byte address 0x4 - core index']
  #allocation1 [shape = 'u32[72,128]{1,0:T(1,128)}', space=vmem, size = 0x9000, scoped, tag = 'internal scratch']
  %s0 = inlined_call_operand.vmem [shape: f32[3], index: 0, kind: input, shape index: {}]
  %s1 = inlined_call_operand.vmem [shape: f32[2,128], index: 1, kind: input, shape index: {}]
  %s2 = inlined_call_operand.vmem [shape: f32[1,128], index: 2, kind: output, shape index: {}]
  %s3 = sld [smem:[#allocation0]]
  $region22: #{linreg_forward.1} parent=0
    _
  %s5 = ssub.s32 1, %s3
  %s6 = scalar_select 0, %s5, %s3
  $region1: #{linreg_forward.1} parent=0
    #allocation2 [shape = 'u8[512]{0}', space=smem, size = 0x200, scoped, tag = 'input window, operand 0, single buffered']
    #allocation3 [shape = 's32[1]{0}', space=sflag, size = 0x4, scoped, tag = 'scoped memory for linreg_forward.1']
    %7 = vsyncpa [#allocation3], 0
    // Predicated region
    $region2: #{linreg_forward.1} parent=1 // pred_check
      _
    $region3: #{linreg_forward.1} parent=1 // pred_check_branch
      %9 = sbr.rel (0) target = $region5
    $region4: #{linreg_forward.1} parent=1 // pred_region
      %11 = vsyncadd [#allocation3], 0
      %s13 = sshll.u32 %s0, 4
      %s14 = int_to_ptr.vmem [resolvable:$true] %s13
      %16 = dma.vmem_to_smem %s14, 16, [#allocation2], [#allocation3]
    $region5: #{linreg_forward.1} parent=1 // pred_fallthru
      _
    // Predicated region
    $region6: #{linreg_forward.1} parent=1 // pred_check
      _
    $region7: #{linreg_forward.1} parent=1 // pred_check_branch
      %18 = sbr.rel (0) target = $region9
    $region8: #{linreg_forward.1} parent=1 // pred_region
      _
    $region9: #{linreg_forward.1} parent=1 // pred_fallthru
      _
    // Predicated region
    $region10: #{linreg_forward.1} parent=1 // pred_check
      _
    $region11: #{linreg_forward.1} parent=1 // pred_check_branch
      %20 = sbr.rel (0) target = $region13
    $region12: #{linreg_forward.1} parent=1 // pred_region
      %22 = dma.done [#allocation3], 16
    $region13: #{linreg_forward.1} parent=1 // pred_fallthru
      _
    %23 = sfence
    %s24 = sld [smem:[#allocation2]]
    %s25 = sld [smem:[#allocation2 + $0x1]]
    %s26 = sld [smem:[#allocation2 + $0x2]]
    %v27 = vld [vmem:[%s1] sm:$0x1]
    %v28 = vld [vmem:[%s1 + $0x1] sm:$0x1]
    %v29 = vstv %s24
    %v30 = vmul.f32 %v27, %v29
    %v31 = vstv %s25
    %v32 = vmul.f32 %v28, %v31
    %v33 = vadd.f32 %v30, %v32
    %v34 = vstv %s26
    %v35 = vadd.f32 %v33, %v34
    %36 = vst [vmem:[%s2] sm:$0x1] %v35
    // Predicated region
    $region14: #{linreg_forward.1} parent=1 // pred_check
      _
    $region15: #{linreg_forward.1} parent=1 // pred_check_branch
      %38 = sbr.rel (0) target = $region17
    $region16: #{linreg_forward.1} parent=1 // pred_region
      _
    $region17: #{linreg_forward.1} parent=1 // pred_fallthru
      _
    // Predicated region
    $region18: #{linreg_forward.1} parent=1 // pred_check
      _
    $region19: #{linreg_forward.1} parent=1 // pred_check_branch
      %40 = sbr.rel (0) target = $region21
    $region20: #{linreg_forward.1} parent=1 // pred_region
      _
    $region21: #{linreg_forward.1} parent=1 // pred_fallthru
      _
    %41 = vsyncpa [#allocation3], 1

</llo_original>
